<compile_context>
chip_gen: v5e
topology: v5e:2x2
jax: 0.10.0
libtpu: 0.0.40
codegen_flags: <defaults>
</compile_context>

<pallas_src>
import math

import jax
import jax.numpy as jnp
from jax.experimental import pallas as pl
from jax.experimental.pallas import tpu as pltpu

F_OUT = 40      # conv1 / conv2 output feature maps
KW1 = 13        # conv1 temporal kernel width
POOL_K = 35     # AvgPool2d kernel (time)
POOL_S = 7      # AvgPool2d stride (time)
BN_EPS = 1e-5


def _encoder_kernel(x_ref, weff_ref, scale_ref, shift_ref, pool_ref, m_ref, y_ref):
    """One batch tile per grid step.  x_ref block: (Bt, C, T)."""
    Bt, C, T = x_ref.shape
    T1 = T - KW1 + 1

    x = x_ref[...]                                                   # (Bt, C, T)

    # --- fused conv1*conv2 as a single MXU matmul over an im2col slab ----
    # rows ordered (k, c) to match the W_eff layout built in the wrapper.
    xcol = jnp.concatenate([x[:, :, k:k + T1] for k in range(KW1)],
                           axis=1)                                   # (Bt, KW1*C, T1)
    weff = jnp.broadcast_to(weff_ref[...][None], (Bt,) + weff_ref.shape)
    h = jnp.einsum("bfr,brt->bft", weff, xcol,
                   preferred_element_type=jnp.float32)               # (Bt, 40, T1)

    # --- BatchNorm (eval, conv1 bias folded into shift) + square (VPU) ---
    h = h * scale_ref[...] + shift_ref[...]                          # (1,40,1) bcast
    h = h * h

    # --- AvgPool2d((1,35),(1,7)) as one matmul with a (T1, P) pool matrix
    pm = jnp.broadcast_to(pool_ref[...][None], (Bt,) + pool_ref.shape)
    pooled = jnp.einsum("bft,btp->bfp", h, pm,
                        preferred_element_type=jnp.float32)          # (Bt, 40, P)
    logp = jnp.log(jnp.clip(pooled, 1e-7, 1e4))

    # TODO(synk): Dropout(0.5) is identity at inference; no RNG mask generated.

    # --- Flatten + AdaptiveAvgPool1d(latent) as a fixed linear map (exact VPU)
    prod = m_ref[...][None, :, :, :] * logp[:, None, :, :]           # (Bt, L, 40, P)
    y = jnp.sum(jnp.sum(prod, axis=3), axis=2)                       # (Bt, latent)
    y_ref[...] = y


def shallow_convnet_encoder(x, params, latent_dim):
    """x: (B, 1, C, T) float32 (NCHW, as in PyTorch). Returns (B, latent_dim)."""
    w1 = params["conv1_w"]; b1 = params["conv1_b"]; w2 = params["conv2_w"]
    gamma = params["bn_gamma"]; beta = params["bn_beta"]
    rmean = params["bn_mean"]; rvar = params["bn_var"]

    B, _, C, T = x.shape
    T1 = T - KW1 + 1
    assert T1 >= POOL_K, "time dimension too small for AvgPool2d((1,35))"
    P = (T1 - POOL_K) // POOL_S + 1
    L = F_OUT * P

    # ---- parameter massaging (plain JAX glue) ----
    w1_2d = w1[:, 0, 0, :].astype(jnp.float32)                       # (40, 13)
    w2_3d = w2[:, :, :, 0].astype(jnp.float32)                       # (40, 40, C) [f,g,c]
    # fused conv weight, row order (k, c) matching the in-kernel concat
    w_eff = jnp.einsum("gk,fgc->fkc", w1_2d, w2_3d).reshape(F_OUT, KW1 * C)
    eff_bias = jnp.einsum("fgc,g->f", w2_3d, b1.astype(jnp.float32))  # conv1 bias thru conv2
    scale = gamma / jnp.sqrt(rvar + BN_EPS)
    shift = (eff_bias - rmean) * scale + beta
    scale3 = scale.reshape(1, F_OUT, 1).astype(jnp.float32)
    shift3 = shift.reshape(1, F_OUT, 1).astype(jnp.float32)

    # pooling matrix: column p averages columns [7p, 7p+35)
    t_idx = jnp.arange(T1)[:, None]
    p_idx = jnp.arange(P)[None, :]
    pool_mat = (((t_idx >= POOL_S * p_idx) & (t_idx < POOL_S * p_idx + POOL_K))
                .astype(jnp.float32) / float(POOL_K))                # (T1, P)

    # flatten + AdaptiveAvgPool1d(latent_dim) as one (latent, 40, P) linear map;
    # PyTorch flatten order is n = f*P + p.
    n = jnp.arange(L)
    i = jnp.arange(latent_dim)
    start = (i * L) // latent_dim
    end = -((-(i + 1) * L) // latent_dim)                            # ceil((i+1)*L/latent)
    M = ((n[None, :] >= start[:, None]) & (n[None, :] < end[:, None])).astype(jnp.float32)
    M = M / (end - start)[:, None].astype(jnp.float32)               # (latent, L)
    m3 = M.reshape(latent_dim, F_OUT, P)

    x3 = x[:, 0, :, :].astype(jnp.float32)                           # (B, C, T)

    # Batch tile per grid step.  The (Bt, latent) output block's sublane dim
    # must be a multiple of 8 or equal B.
    Bt = 8 if (B % 8 == 0 and B > 8) else B
    grid = (B // Bt,)

    out = pl.pallas_call(
        _encoder_kernel,
        out_shape=jax.ShapeDtypeStruct((B, latent_dim), jnp.float32),
        grid=grid,
        in_specs=[
            pl.BlockSpec((Bt, C, T), lambda b: (b, 0, 0)),
            pl.BlockSpec((F_OUT, KW1 * C), lambda b: (0, 0)),
            pl.BlockSpec((1, F_OUT, 1), lambda b: (0, 0, 0)),
            pl.BlockSpec((1, F_OUT, 1), lambda b: (0, 0, 0)),
            pl.BlockSpec((T1, P), lambda b: (0, 0)),
            pl.BlockSpec((latent_dim, F_OUT, P), lambda b: (0, 0, 0)),
        ],
        out_specs=pl.BlockSpec((Bt, latent_dim), lambda b: (b, 0)),
        compiler_params=pltpu.CompilerParams(
            dimension_semantics=("parallel",)),
    )(x3, w_eff, scale3, shift3, pool_mat, m3)
    return out


def reference_forward(x, params, latent_dim):
    """Plain-JAX reference of the PyTorch forward (eval mode)."""
    w1 = params["conv1_w"]; b1 = params["conv1_b"]; w2 = params["conv2_w"]
    gamma = params["bn_gamma"]; beta = params["bn_beta"]
    rmean = params["bn_mean"]; rvar = params["bn_var"]
    B, _, C, T = x.shape
    T1 = T - KW1 + 1
    xw = jnp.stack([x[:, 0, :, k:k + T1] for k in range(KW1)], axis=-1)   # (B,C,T1,13)
    h1 = jnp.einsum("bctk,fk->bfct", xw, w1[:, 0, 0, :]) + b1[None, :, None, None]
    h2 = jnp.einsum("bgct,fgc->bft", h1, w2[:, :, :, 0])                  # (B,40,T1)
    h2 = (h2 - rmean[None, :, None]) / jnp.sqrt(rvar + BN_EPS)[None, :, None]
    h2 = h2 * gamma[None, :, None] + beta[None, :, None]
    h2 = h2 * h2
    P = (T1 - POOL_K) // POOL_S + 1
    pooled = jnp.stack(
        [h2[:, :, POOL_S * j: POOL_S * j + POOL_K].mean(axis=-1) for j in range(P)],
        axis=-1)                                                           # (B,40,P)
    pooled = jnp.log(jnp.clip(pooled, 1e-7, 1e4))
    flat = pooled.reshape(B, -1)
    L = flat.shape[1]
    outs = []
    for i in range(latent_dim):
        s = (i * L) // latent_dim
        e = math.ceil((i + 1) * L / latent_dim)
        outs.append(flat[:, s:e].mean(axis=1))
    return jnp.stack(outs, axis=1)


if __name__ == "__main__":
    B, C, T, latent_dim = 2, 4, 96, 8
    key = jax.random.PRNGKey(0)
    kx, k1, k2, k3, k4, k5, k6, k7 = jax.random.split(key, 8)
    x = jax.random.normal(kx, (B, 1, C, T), jnp.float32)

    bnd1 = 1.0 / math.sqrt(1 * 1 * KW1)           # PyTorch default uniform bound
    bnd2 = 1.0 / math.sqrt(F_OUT * C * 1)
    params = dict(
        conv1_w=jax.random.uniform(k1, (F_OUT, 1, 1, KW1), jnp.float32, -bnd1, bnd1),
        conv1_b=jax.random.uniform(k2, (F_OUT,), jnp.float32, -bnd1, bnd1),
        conv2_w=jax.random.uniform(k3, (F_OUT, F_OUT, C, 1), jnp.float32, -bnd2, bnd2),
        bn_gamma=jax.random.uniform(k4, (F_OUT,), jnp.float32, 0.5, 1.5),
        bn_beta=0.1 * jax.random.normal(k5, (F_OUT,), jnp.float32),
        bn_mean=0.1 * jax.random.normal(k6, (F_OUT,), jnp.float32),
        bn_var=jax.random.uniform(k7, (F_OUT,), jnp.float32, 0.5, 1.5),
    )

    y = jax.block_until_ready(shallow_convnet_encoder(x, params, latent_dim))
    y_ref = jax.block_until_ready(reference_forward(x, params, latent_dim))

    assert y.shape == (B, latent_dim), y.shape
    # tolerance covers the MXU reduced-precision f32 matmul path
    assert jnp.allclose(y, y_ref, atol=3e-2, rtol=3e-2), (y, y_ref)
    print("KERNEL_OK")
</pallas_src>

<mosaic_0001>
module attributes {stable_mosaic.version = 11 : i64} {
  func.func @_encoder_kernel(%arg0: i32, %arg1: memref<2x4x96xf32, #tpu.memory_space<vmem>>, %arg2: memref<40x52xf32, #tpu.memory_space<vmem>>, %arg3: memref<1x40x1xf32, #tpu.memory_space<vmem>>, %arg4: memref<1x40x1xf32, #tpu.memory_space<vmem>>, %arg5: memref<84x8xf32, #tpu.memory_space<vmem>>, %arg6: memref<8x40x8xf32, #tpu.memory_space<vmem>>, %arg7: memref<2x8xf32, #tpu.memory_space<vmem>>) attributes {dimension_semantics = [#tpu.dimension_semantics<parallel>], iteration_bounds = array<i64: 1>, scalar_prefetch = 0 : i64, scratch_operands = 0 : i64, tpu.core_type = #tpu.core_type<tc>, window_params = [{transform_indices = @transform_0, window_bounds = array<i64: 2, 4, 96>}, {pipeline_mode = #tpu.pipeline_mode<synchronous>, transform_indices = @transform_1, window_bounds = array<i64: 40, 52>}, {pipeline_mode = #tpu.pipeline_mode<synchronous>, transform_indices = @transform_2, window_bounds = array<i64: 1, 40, 1>}, {pipeline_mode = #tpu.pipeline_mode<synchronous>, transform_indices = @transform_3, window_bounds = array<i64: 1, 40, 1>}, {pipeline_mode = #tpu.pipeline_mode<synchronous>, transform_indices = @transform_4, window_bounds = array<i64: 84, 8>}, {pipeline_mode = #tpu.pipeline_mode<synchronous>, transform_indices = @transform_5, window_bounds = array<i64: 8, 40, 8>}, {transform_indices = @transform_6, window_bounds = array<i64: 2, 8>}]} {
    %c0 = arith.constant 0 : index
    %c0_0 = arith.constant 0 : index
    %c0_1 = arith.constant 0 : index
    %0 = vector.load %arg1[%c0, %c0_0, %c0_1] : memref<2x4x96xf32, #tpu.memory_space<vmem>>, vector<2x4x96xf32>
    %1 = vector.extract_strided_slice %0 {offsets = [0, 0, 0], sizes = [2, 4, 84], strides = [1, 1, 1]} : vector<2x4x96xf32> to vector<2x4x84xf32>
    %2 = vector.extract_strided_slice %0 {offsets = [0, 0, 1], sizes = [2, 4, 84], strides = [1, 1, 1]} : vector<2x4x96xf32> to vector<2x4x84xf32>
    %3 = vector.extract_strided_slice %0 {offsets = [0, 0, 2], sizes = [2, 4, 84], strides = [1, 1, 1]} : vector<2x4x96xf32> to vector<2x4x84xf32>
    %4 = vector.extract_strided_slice %0 {offsets = [0, 0, 3], sizes = [2, 4, 84], strides = [1, 1, 1]} : vector<2x4x96xf32> to vector<2x4x84xf32>
    %5 = vector.extract_strided_slice %0 {offsets = [0, 0, 4], sizes = [2, 4, 84], strides = [1, 1, 1]} : vector<2x4x96xf32> to vector<2x4x84xf32>
    %6 = vector.extract_strided_slice %0 {offsets = [0, 0, 5], sizes = [2, 4, 84], strides = [1, 1, 1]} : vector<2x4x96xf32> to vector<2x4x84xf32>
    %7 = vector.extract_strided_slice %0 {offsets = [0, 0, 6], sizes = [2, 4, 84], strides = [1, 1, 1]} : vector<2x4x96xf32> to vector<2x4x84xf32>
    %8 = vector.extract_strided_slice %0 {offsets = [0, 0, 7], sizes = [2, 4, 84], strides = [1, 1, 1]} : vector<2x4x96xf32> to vector<2x4x84xf32>
    %9 = vector.extract_strided_slice %0 {offsets = [0, 0, 8], sizes = [2, 4, 84], strides = [1, 1, 1]} : vector<2x4x96xf32> to vector<2x4x84xf32>
    %10 = vector.extract_strided_slice %0 {offsets = [0, 0, 9], sizes = [2, 4, 84], strides = [1, 1, 1]} : vector<2x4x96xf32> to vector<2x4x84xf32>
    %11 = vector.extract_strided_slice %0 {offsets = [0, 0, 10], sizes = [2, 4, 84], strides = [1, 1, 1]} : vector<2x4x96xf32> to vector<2x4x84xf32>
    %12 = vector.extract_strided_slice %0 {offsets = [0, 0, 11], sizes = [2, 4, 84], strides = [1, 1, 1]} : vector<2x4x96xf32> to vector<2x4x84xf32>
    %13 = vector.extract_strided_slice %0 {offsets = [0, 0, 12], sizes = [2, 4, 84], strides = [1, 1, 1]} : vector<2x4x96xf32> to vector<2x4x84xf32>
    %14 = tpu.concatenate %1, %2, %3, %4, %5, %6, %7, %8, %9, %10, %11, %12, %13 in 1 : vector<2x4x84xf32>, vector<2x4x84xf32>, vector<2x4x84xf32>, vector<2x4x84xf32>, vector<2x4x84xf32>, vector<2x4x84xf32>, vector<2x4x84xf32>, vector<2x4x84xf32>, vector<2x4x84xf32>, vector<2x4x84xf32>, vector<2x4x84xf32>, vector<2x4x84xf32>, vector<2x4x84xf32> -> vector<2x52x84xf32>
    %c0_2 = arith.constant 0 : index
    %c0_3 = arith.constant 0 : index
    %15 = vector.load %arg2[%c0_2, %c0_3] : memref<40x52xf32, #tpu.memory_space<vmem>>, vector<40x52xf32>
    %16 = vector.shape_cast %15 : vector<40x52xf32> to vector<1x40x52xf32>
    %17 = vector.shape_cast %16 : vector<1x40x52xf32> to vector<1x40x52xf32>
    %18 = vector.broadcast %17 : vector<1x40x52xf32> to vector<2x40x52xf32>
    "tpu.trace_start"() <{level = 10 : i32, message = "bfr,brt->bft"}> : () -> ()
    %cst = arith.constant dense<0.000000e+00> : vector<2x40x84xf32>
    %19 = tpu.matmul %18, %14, %cst {dimension_numbers = #tpu.dot_dimension_numbers<[2], [1], [1], [2], [0, 0, 0, 1, 1, 2], [0], [0]>} : vector<2x40x52xf32>, vector<2x52x84xf32>, vector<2x40x84xf32> -> vector<2x40x84xf32>
    "tpu.trace_stop"() : () -> ()
    %c0_4 = arith.constant 0 : index
    %c0_5 = arith.constant 0 : index
    %c0_6 = arith.constant 0 : index
    %20 = vector.load %arg3[%c0_4, %c0_5, %c0_6] : memref<1x40x1xf32, #tpu.memory_space<vmem>>, vector<1x40x1xf32>
    %21 = vector.broadcast %20 : vector<1x40x1xf32> to vector<2x40x84xf32>
    %22 = arith.mulf %19, %21 : vector<2x40x84xf32>
    %c0_7 = arith.constant 0 : index
    %c0_8 = arith.constant 0 : index
    %c0_9 = arith.constant 0 : index
    %23 = vector.load %arg4[%c0_7, %c0_8, %c0_9] : memref<1x40x1xf32, #tpu.memory_space<vmem>>, vector<1x40x1xf32>
    %24 = vector.broadcast %23 : vector<1x40x1xf32> to vector<2x40x84xf32>
    %25 = arith.addf %22, %24 : vector<2x40x84xf32>
    %26 = arith.mulf %25, %25 : vector<2x40x84xf32>
    %c0_10 = arith.constant 0 : index
    %c0_11 = arith.constant 0 : index
    %27 = vector.load %arg5[%c0_10, %c0_11] : memref<84x8xf32, #tpu.memory_space<vmem>>, vector<84x8xf32>
    %28 = vector.shape_cast %27 : vector<84x8xf32> to vector<1x84x8xf32>
    %29 = vector.shape_cast %28 : vector<1x84x8xf32> to vector<1x84x8xf32>
    %30 = vector.broadcast %29 : vector<1x84x8xf32> to vector<2x84x8xf32>
    "tpu.trace_start"() <{level = 10 : i32, message = "bft,btp->bfp"}> : () -> ()
    %cst_12 = arith.constant dense<0.000000e+00> : vector<2x40x8xf32>
    %31 = tpu.matmul %26, %30, %cst_12 {dimension_numbers = #tpu.dot_dimension_numbers<[2], [1], [1], [2], [0, 0, 0, 1, 1, 2], [0], [0]>} : vector<2x40x84xf32>, vector<2x84x8xf32>, vector<2x40x8xf32> -> vector<2x40x8xf32>
    %cst_13 = arith.constant 1.000000e-07 : f32
    %cst_14 = arith.constant 1.000000e+04 : f32
    "tpu.trace_stop"() : () -> ()
    %32 = vector.broadcast %cst_13 : f32 to vector<2x40x8xf32>
    %33 = arith.maximumf %32, %31 : vector<2x40x8xf32>
    %34 = vector.broadcast %cst_14 : f32 to vector<2x40x8xf32>
    %35 = arith.minimumf %34, %33 : vector<2x40x8xf32>
    %36 = math.log %35 : vector<2x40x8xf32>
    %c0_15 = arith.constant 0 : index
    %c0_16 = arith.constant 0 : index
    %c0_17 = arith.constant 0 : index
    %37 = vector.load %arg6[%c0_15, %c0_16, %c0_17] : memref<8x40x8xf32, #tpu.memory_space<vmem>>, vector<8x40x8xf32>
    %38 = vector.shape_cast %37 : vector<8x40x8xf32> to vector<1x8x40x8xf32>
    %39 = vector.shape_cast %36 : vector<2x40x8xf32> to vector<2x1x40x8xf32>
    %40 = vector.broadcast %38 : vector<1x8x40x8xf32> to vector<2x8x40x8xf32>
    %41 = vector.broadcast %39 : vector<2x1x40x8xf32> to vector<2x8x40x8xf32>
    %42 = arith.mulf %40, %41 : vector<2x8x40x8xf32>
    %cst_18 = arith.constant dense<0.000000e+00> : vector<2x8x40xf32>
    %43 = vector.multi_reduction <add>, %42, %cst_18 [3] : vector<2x8x40x8xf32> to vector<2x8x40xf32>
    %cst_19 = arith.constant dense<0.000000e+00> : vector<2x8xf32>
    %44 = vector.multi_reduction <add>, %43, %cst_19 [2] : vector<2x8x40xf32> to vector<2x8xf32>
    %c0_20 = arith.constant 0 : index
    %c0_21 = arith.constant 0 : index
    %45 = vector.load %arg7[%c0_20, %c0_21] : memref<2x8xf32, #tpu.memory_space<vmem>>, vector<2x8xf32>
    tpu.vector_store %arg7[%c0_20, %c0_21], %44 {strides = array<i32>} : memref<2x8xf32, #tpu.memory_space<vmem>>, vector<2x8xf32>,
    return
  }
  func.func @transform_0(%arg0: i32) -> (i32, i32, i32) {
    %c0_i32 = arith.constant 0 : i32
    %c0_i32_0 = arith.constant 0 : i32
    %c0_i32_1 = arith.constant 0 : i32
    return %arg0, %c0_i32, %c0_i32_0 : i32, i32, i32
  }
  func.func @transform_1(%arg0: i32) -> (i32, i32) {
    %c0_i32 = arith.constant 0 : i32
    %c0_i32_0 = arith.constant 0 : i32
    %c0_i32_1 = arith.constant 0 : i32
    return %c0_i32, %c0_i32_0 : i32, i32
  }
  func.func @transform_2(%arg0: i32) -> (i32, i32, i32) {
    %c0_i32 = arith.constant 0 : i32
    %c0_i32_0 = arith.constant 0 : i32
    %c0_i32_1 = arith.constant 0 : i32
    %c0_i32_2 = arith.constant 0 : i32
    return %c0_i32, %c0_i32_0, %c0_i32_1 : i32, i32, i32
  }
  func.func @transform_3(%arg0: i32) -> (i32, i32, i32) {
    %c0_i32 = arith.constant 0 : i32
    %c0_i32_0 = arith.constant 0 : i32
    %c0_i32_1 = arith.constant 0 : i32
    %c0_i32_2 = arith.constant 0 : i32
    return %c0_i32, %c0_i32_0, %c0_i32_1 : i32, i32, i32
  }
  func.func @transform_4(%arg0: i32) -> (i32, i32) {
    %c0_i32 = arith.constant 0 : i32
    %c0_i32_0 = arith.constant 0 : i32
    %c0_i32_1 = arith.constant 0 : i32
    return %c0_i32, %c0_i32_0 : i32, i32
  }
  func.func @transform_5(%arg0: i32) -> (i32, i32, i32) {
    %c0_i32 = arith.constant 0 : i32
    %c0_i32_0 = arith.constant 0 : i32
    %c0_i32_1 = arith.constant 0 : i32
    %c0_i32_2 = arith.constant 0 : i32
    return %c0_i32, %c0_i32_0, %c0_i32_1 : i32, i32, i32
  }
  func.func @transform_6(%arg0: i32) -> (i32, i32) {
    %c0_i32 = arith.constant 0 : i32
    %c0_i32_0 = arith.constant 0 : i32
    return %arg0, %c0_i32 : i32, i32
  }
}

</mosaic_0001>

<llo_original>
// kernel: tpu_custom_call.1
$region0: #{tpu_custom_call.1}
  #allocation0 [shape = 'u32[]', space=smem, size = 0x4, offset = 0x4, fixed_abs, tag = 'smem constant byte address 0x4 - core index']
  #allocation1 [shape = 'u32[72,128]{1,0:T(1,128)}', space=vmem, size = 0x9000, scoped, tag = 'internal scratch']
  %s0 = inlined_call_operand.vmem [shape: f32[2,4,96], index: 0, kind: input, shape index: {}]
  %s1 = inlined_call_operand.vmem [shape: f32[40,52], index: 1, kind: input, shape index: {}]
  %s2 = inlined_call_operand.vmem [shape: f32[1,40,1], index: 2, kind: input, shape index: {}]
  %s3 = inlined_call_operand.vmem [shape: f32[1,40,1], index: 3, kind: input, shape index: {}]
  %s4 = inlined_call_operand.vmem [shape: f32[84,8], index: 4, kind: input, shape index: {}]
  %s5 = inlined_call_operand.vmem [shape: f32[8,40,8], index: 5, kind: input, shape index: {}]
  %s6 = inlined_call_operand.hbm [shape: f32[2,8], index: 6, kind: output, shape index: {}]
  %s7 = sld [smem:[#allocation0]]
  $region34: #{tpu_custom_call.1} parent=0
    _
  %s9 = ssub.s32 1, %s7
  %s10 = scalar_select 0, %s9, %s7
  $region1: #{tpu_custom_call.1} parent=0
    #allocation2 [shape = 'u8[1024]{0}', space=vmem, size = 0x400, scoped, tag = 'output window, operand 0, single buffered']
    #allocation3 [shape = 's32[1]{0}', space=sflag, size = 0x4, scoped, tag = 'scoped memory for tpu_custom_call.1']
    %11 = vsyncpa [#allocation3], 0
    // Predicated region
    $region2: #{tpu_custom_call.1} parent=1 // pred_check
      _
    $region3: #{tpu_custom_call.1} parent=1 // pred_check_branch
      %13 = sbr.rel (0) target = $region5
    $region4: #{tpu_custom_call.1} parent=1 // pred_region
      _
    $region5: #{tpu_custom_call.1} parent=1 // pred_fallthru
      _
    // Predicated region
    $region6: #{tpu_custom_call.1} parent=1 // pred_check
      _
    $region7: #{tpu_custom_call.1} parent=1 // pred_check_branch
      %15 = sbr.rel (0) target = $region9
    $region8: #{tpu_custom_call.1} parent=1 // pred_region
      _
    $region9: #{tpu_custom_call.1} parent=1 // pred_fallthru
      _
    // Predicated region
    $region10: #{tpu_custom_call.1} parent=1 // pred_check
      _
    $region11: #{tpu_custom_call.1} parent=1 // pred_check_branch
      %17 = sbr.rel (0) target = $region13
    $region12: #{tpu_custom_call.1} parent=1 // pred_region
      _
    $region13: #{tpu_custom_call.1} parent=1 // pred_fallthru
      _
    // Predicated region
    $region14: #{tpu_custom_call.1} parent=1 // pred_check
      _
    $region15: #{tpu_custom_call.1} parent=1 // pred_check_branch
      %19 = sbr.rel (0) target = $region17
    $region16: #{tpu_custom_call.1} parent=1 // pred_region
      _
    $region17: #{tpu_custom_call.1} parent=1 // pred_fallthru
      _
    // Predicated region
    $region18: #{tpu_custom_call.1} parent=1 // pred_check
      _
    $region19: #{tpu_custom_call.1} parent=1 // pred_check_branch
      %21 = sbr.rel (0) target = $region21
    $region20: #{tpu_custom_call.1} parent=1 // pred_region
      _
    $region21: #{tpu_custom_call.1} parent=1 // pred_fallthru
      _
    // Predicated region
    $region22: #{tpu_custom_call.1} parent=1 // pred_check
      _
    $region23: #{tpu_custom_call.1} parent=1 // pred_check_branch
      %23 = sbr.rel (0) target = $region25
    $region24: #{tpu_custom_call.1} parent=1 // pred_region
      _
    $region25: #{tpu_custom_call.1} parent=1 // pred_fallthru
      _
    %v24 = vld [vmem:[%s0] sm:$0xf]
    %v25 = vld [vmem:[%s0 + $0x4] sm:$0xf]
    %v28 = vrot.slane %v24, 4
    %v29 = vrot.slane %v25, 4
    %30 = vrot.lane.b32.xlu0 %v28, 127
    %v31 = vpop.permute.xlu0 %30
    %32 = vrot.lane.b32.xlu0 %v29, 127
    %v33 = vpop.permute.xlu0 %32
    %36 = vrot.lane.b32.xlu0 %v24, 126
    %v37 = vpop.permute.xlu0 %36
    %38 = vrot.lane.b32.xlu0 %v25, 126
    %v39 = vpop.permute.xlu0 %38
    %42 = vrot.lane.b32.xlu0 %v28, 125
    %v43 = vpop.permute.xlu0 %42
    %44 = vrot.lane.b32.xlu0 %v29, 125
    %v45 = vpop.permute.xlu0 %44
    %48 = vrot.lane.b32.xlu0 %v24, 124
    %v49 = vpop.permute.xlu0 %48
    %50 = vrot.lane.b32.xlu0 %v25, 124
    %v51 = vpop.permute.xlu0 %50
    %54 = vrot.lane.b32.xlu0 %v28, 123
    %v55 = vpop.permute.xlu0 %54
    %56 = vrot.lane.b32.xlu0 %v29, 123
    %v57 = vpop.permute.xlu0 %56
    %60 = vrot.lane.b32.xlu0 %v24, 122
    %v61 = vpop.permute.xlu0 %60
    %62 = vrot.lane.b32.xlu0 %v25, 122
    %v63 = vpop.permute.xlu0 %62
    %66 = vrot.lane.b32.xlu0 %v28, 121
    %v67 = vpop.permute.xlu0 %66
    %68 = vrot.lane.b32.xlu0 %v29, 121
    %v69 = vpop.permute.xlu0 %68
    %72 = vrot.lane.b32.xlu0 %v24, 120
    %v73 = vpop.permute.xlu0 %72
    %74 = vrot.lane.b32.xlu0 %v25, 120
    %v75 = vpop.permute.xlu0 %74
    %78 = vrot.lane.b32.xlu0 %v28, 119
    %v79 = vpop.permute.xlu0 %78
    %80 = vrot.lane.b32.xlu0 %v29, 119
    %v81 = vpop.permute.xlu0 %80
    %84 = vrot.lane.b32.xlu0 %v24, 118
    %v85 = vpop.permute.xlu0 %84
    %86 = vrot.lane.b32.xlu0 %v25, 118
    %v87 = vpop.permute.xlu0 %86
    %90 = vrot.lane.b32.xlu0 %v28, 117
    %v91 = vpop.permute.xlu0 %90
    %92 = vrot.lane.b32.xlu0 %v29, 117
    %v93 = vpop.permute.xlu0 %92
    %96 = vrot.lane.b32.xlu0 %v24, 116
    %v97 = vpop.permute.xlu0 %96
    %98 = vrot.lane.b32.xlu0 %v25, 116
    %v99 = vpop.permute.xlu0 %98
    %vm100 = vcmask 1043456
    %v101 = vsel %vm100, %v24, %v31
    %v102 = vsel %vm100, %v25, %v33
    %v103 = vsel %vm100, %v37, %v43
    %v104 = vsel %vm100, %v39, %v45
    %v105 = vsel %vm100, %v49, %v55
    %v106 = vsel %vm100, %v51, %v57
    %v107 = vsel %vm100, %v61, %v67
    %v108 = vsel %vm100, %v63, %v69
    %v109 = vsel %vm100, %v73, %v79
    %v110 = vsel %vm100, %v75, %v81
    %v111 = vsel %vm100, %v85, %v91
    %v112 = vsel %vm100, %v87, %v93
    %v113 = vld [vmem:[%s1] sm:$0xff]
    %v114 = vld [vmem:[%s1 + $0x8] sm:$0xff]
    %v115 = vld [vmem:[%s1 + $0x10] sm:$0xff]
    %v116 = vld [vmem:[%s1 + $0x18] sm:$0xff]
    %v117 = vld [vmem:[%s1 + $0x20] sm:$0xff]
    %vm118 = vcmask 424960
    %v120 = vsel %vm118, %v113, 0
    %v123 = vsel %vm118, %v114, 0
    %v126 = vsel %vm118, %v115, 0
    %v129 = vsel %vm118, %v116, 0
    %v132 = vsel %vm118, %v117, 0
    %v134 = vsel %vm100, %v97, 0
    %136 = vmatpush.msra.mxu0 0.0
    %137 = vmatpush.msra.mxu0 0.0
    %138 = vmatpush.msra.mxu0 0.0
    %139 = vmatpush.msra.mxu0 0.0
    %140 = vmatpush.msra.mxu0 0.0
    %141 = vmatpush.msra.mxu0 0.0
    %142 = vmatpush.msra.mxu0 0.0
    %143 = vmatpush.msra.mxu0 0.0
    %144 = vmatpush.msra.mxu0 0.0
    %145 = vmatpush.msra.mxu0 %v134
    %146 = vmatpush.msra.mxu0 %v111
    %147 = vmatpush.msra.mxu0 %v109
    %148 = vmatpush.msra.mxu0 %v107
    %149 = vmatpush.msra.mxu0 %v105
    %150 = vmatpush.msra.mxu0 %v103
    %151 = vmatpush.msra.mxu0 %v101
    %152 = vmatmul.f32.gmra.mxu0 %v120
    %v153 = vpop.f32.mrf.mxu0
    %v154 = vadd.f32 0.0, %v153
    %155 = vmatmul.f32.gmra.mxu0 %v123
    %v156 = vpop.f32.mrf.mxu0
    %v157 = vadd.f32 0.0, %v156
    %158 = vmatmul.f32.gmra.mxu0 %v126
    %v159 = vpop.f32.mrf.mxu0
    %v160 = vadd.f32 0.0, %v159
    %161 = vmatmul.f32.gmra.mxu0 %v129
    %v162 = vpop.f32.mrf.mxu0
    %v163 = vadd.f32 0.0, %v162
    %164 = vmatmul.f32.gmra.mxu0 %v132
    %v165 = vpop.f32.mrf.mxu0
    %v166 = vadd.f32 0.0, %v165
    %167 = vdwg.mxu0
    %v168 = vsel %vm100, %v99, 0
    %170 = vmatpush.msra.mxu0 0.0
    %171 = vmatpush.msra.mxu0 0.0
    %172 = vmatpush.msra.mxu0 0.0
    %173 = vmatpush.msra.mxu0 0.0
    %174 = vmatpush.msra.mxu0 0.0
    %175 = vmatpush.msra.mxu0 0.0
    %176 = vmatpush.msra.mxu0 0.0
    %177 = vmatpush.msra.mxu0 0.0
    %178 = vmatpush.msra.mxu0 0.0
    %179 = vmatpush.msra.mxu0 %v168
    %180 = vmatpush.msra.mxu0 %v112
    %181 = vmatpush.msra.mxu0 %v110
    %182 = vmatpush.msra.mxu0 %v108
    %183 = vmatpush.msra.mxu0 %v106
    %184 = vmatpush.msra.mxu0 %v104
    %185 = vmatpush.msra.mxu0 %v102
    %186 = vmatmul.f32.gmra.mxu0 %v120
    %v187 = vpop.f32.mrf.mxu0
    %v188 = vadd.f32 0.0, %v187
    %189 = vmatmul.f32.gmra.mxu0 %v123
    %v190 = vpop.f32.mrf.mxu0
    %v191 = vadd.f32 0.0, %v190
    %192 = vmatmul.f32.gmra.mxu0 %v126
    %v193 = vpop.f32.mrf.mxu0
    %v194 = vadd.f32 0.0, %v193
    %195 = vmatmul.f32.gmra.mxu0 %v129
    %v196 = vpop.f32.mrf.mxu0
    %v197 = vadd.f32 0.0, %v196
    %198 = vmatmul.f32.gmra.mxu0 %v132
    %v199 = vpop.f32.mrf.mxu0
    %v200 = vadd.f32 0.0, %v199
    %201 = vdwg.mxu0
    %v202 = vld [vmem:[%s2] sm:$0xff]
    %v203 = vld [vmem:[%s2 + $0x8] sm:$0xff]
    %v204 = vld [vmem:[%s2 + $0x10] sm:$0xff]
    %v205 = vld [vmem:[%s2 + $0x18] sm:$0xff]
    %v206 = vld [vmem:[%s2 + $0x20] sm:$0xff]
    %208 = vset.pattern.permute.xlu0 0
    %209 = vperm.xlu0 %208, %v202
    %v210 = vpop.permute.xlu0 %209
    %213 = vset.pattern.permute.xlu0 0
    %214 = vperm.xlu0 %213, %v203
    %v215 = vpop.permute.xlu0 %214
    %218 = vset.pattern.permute.xlu0 0
    %219 = vperm.xlu0 %218, %v204
    %v220 = vpop.permute.xlu0 %219
    %223 = vset.pattern.permute.xlu0 0
    %224 = vperm.xlu0 %223, %v205
    %v225 = vpop.permute.xlu0 %224
    %228 = vset.pattern.permute.xlu0 0
    %229 = vperm.xlu0 %228, %v206
    %v230 = vpop.permute.xlu0 %229
    %v232 = vmul.f32 %v154, %v210
    %v233 = vmul.f32 %v157, %v215
    %v234 = vmul.f32 %v160, %v220
    %v235 = vmul.f32 %v163, %v225
    %v236 = vmul.f32 %v166, %v230
    %v237 = vmul.f32 %v188, %v210
    %v238 = vmul.f32 %v191, %v215
    %v239 = vmul.f32 %v194, %v220
    %v240 = vmul.f32 %v197, %v225
    %v241 = vmul.f32 %v200, %v230
    %v242 = vld [vmem:[%s3] sm:$0xff]
    %v243 = vld [vmem:[%s3 + $0x8] sm:$0xff]
    %v244 = vld [vmem:[%s3 + $0x10] sm:$0xff]
    %v245 = vld [vmem:[%s3 + $0x18] sm:$0xff]
    %v246 = vld [vmem:[%s3 + $0x20] sm:$0xff]
    %248 = vset.pattern.permute.xlu0 0
    %249 = vperm.xlu0 %248, %v242
    %v250 = vpop.permute.xlu0 %249
    %253 = vset.pattern.permute.xlu0 0
    %254 = vperm.xlu0 %253, %v243
    %v255 = vpop.permute.xlu0 %254
    %258 = vset.pattern.permute.xlu0 0
    %259 = vperm.xlu0 %258, %v244
    %v260 = vpop.permute.xlu0 %259
    %263 = vset.pattern.permute.xlu0 0
    %264 = vperm.xlu0 %263, %v245
    %v265 = vpop.permute.xlu0 %264
    %268 = vset.pattern.permute.xlu0 0
    %269 = vperm.xlu0 %268, %v246
    %v270 = vpop.permute.xlu0 %269
    %v272 = vadd.f32 %v232, %v250
    %v273 = vadd.f32 %v233, %v255
    %v274 = vadd.f32 %v234, %v260
    %v275 = vadd.f32 %v235, %v265
    %v276 = vadd.f32 %v236, %v270
    %v277 = vadd.f32 %v237, %v250
    %v278 = vadd.f32 %v238, %v255
    %v279 = vadd.f32 %v239, %v260
    %v280 = vadd.f32 %v240, %v265
    %v281 = vadd.f32 %v241, %v270
    %v282 = vmul.f32 %v272, %v272
    %v283 = vmul.f32 %v273, %v273
    %v284 = vmul.f32 %v274, %v274
    %v285 = vmul.f32 %v275, %v275
    %v286 = vmul.f32 %v276, %v276
    %v287 = vmul.f32 %v277, %v277
    %v288 = vmul.f32 %v278, %v278
    %v289 = vmul.f32 %v279, %v279
    %v290 = vmul.f32 %v280, %v280
    %v291 = vmul.f32 %v281, %v281
    %v292 = vld [vmem:[%s4] sm:$0xff]
    %v293 = vld [vmem:[%s4 + $0x8] sm:$0xff]
    %v294 = vld [vmem:[%s4 + $0x10] sm:$0xff]
    %v295 = vld [vmem:[%s4 + $0x18] sm:$0xff]
    %v296 = vld [vmem:[%s4 + $0x20] sm:$0xff]
    %v297 = vld [vmem:[%s4 + $0x28] sm:$0xff]
    %v298 = vld [vmem:[%s4 + $0x30] sm:$0xff]
    %v299 = vld [vmem:[%s4 + $0x38] sm:$0xff]
    %v300 = vld [vmem:[%s4 + $0x40] sm:$0xff]
    %v301 = vld [vmem:[%s4 + $0x48] sm:$0xff]
    %v302 = vld [vmem:[%s4 + $0x50] sm:$0xf]
    %vm303 = vcmask 687104
    %v305 = vsel %vm303, %v282, 0
    %v308 = vsel %vm303, %v283, 0
    %v311 = vsel %vm303, %v284, 0
    %v314 = vsel %vm303, %v285, 0
    %v317 = vsel %vm303, %v286, 0
    %v320 = vsel %vm100, %v302, 0
    %322 = vmatpush.msra.mxu0 0.0
    %323 = vmatpush.msra.mxu0 0.0
    %324 = vmatpush.msra.mxu0 0.0
    %325 = vmatpush.msra.mxu0 0.0
    %326 = vmatpush.msra.mxu0 0.0
    %327 = vmatpush.msra.mxu0 %v320
    %328 = vmatpush.msra.mxu0 %v301
    %329 = vmatpush.msra.mxu0 %v300
    %330 = vmatpush.msra.mxu0 %v299
    %331 = vmatpush.msra.mxu0 %v298
    %332 = vmatpush.msra.mxu0 %v297
    %333 = vmatpush.msra.mxu0 %v296
    %334 = vmatpush.msra.mxu0 %v295
    %335 = vmatpush.msra.mxu0 %v294
    %336 = vmatpush.msra.mxu0 %v293
    %337 = vmatpush.msra.mxu0 %v292
    %338 = vmatmul.f32.gmra.mxu0 %v305
    %v339 = vpop.f32.mrf.mxu0
    %v340 = vadd.f32 0.0, %v339
    %341 = vmatmul.f32.gmra.mxu0 %v308
    %v342 = vpop.f32.mrf.mxu0
    %v343 = vadd.f32 0.0, %v342
    %344 = vmatmul.f32.gmra.mxu0 %v311
    %v345 = vpop.f32.mrf.mxu0
    %v346 = vadd.f32 0.0, %v345
    %347 = vmatmul.f32.gmra.mxu0 %v314
    %v348 = vpop.f32.mrf.mxu0
    %v349 = vadd.f32 0.0, %v348
    %350 = vmatmul.f32.gmra.mxu0 %v317
    %v351 = vpop.f32.mrf.mxu0
    %v352 = vadd.f32 0.0, %v351
    %353 = vdwg.mxu0
    %v355 = vsel %vm303, %v287, 0
    %v358 = vsel %vm303, %v288, 0
    %v361 = vsel %vm303, %v289, 0
    %v364 = vsel %vm303, %v290, 0
    %v367 = vsel %vm303, %v291, 0
    %369 = vmatpush.msra.mxu0 0.0
    %370 = vmatpush.msra.mxu0 0.0
    %371 = vmatpush.msra.mxu0 0.0
    %372 = vmatpush.msra.mxu0 0.0
    %373 = vmatpush.msra.mxu0 0.0
    %374 = vmatpush.msra.mxu0 %v320
    %375 = vmatpush.msra.mxu0 %v301
    %376 = vmatpush.msra.mxu0 %v300
    %377 = vmatpush.msra.mxu0 %v299
    %378 = vmatpush.msra.mxu0 %v298
    %379 = vmatpush.msra.mxu0 %v297
    %380 = vmatpush.msra.mxu0 %v296
    %381 = vmatpush.msra.mxu0 %v295
    %382 = vmatpush.msra.mxu0 %v294
    %383 = vmatpush.msra.mxu0 %v293
    %384 = vmatpush.msra.mxu0 %v292
    %385 = vmatmul.f32.gmra.mxu0 %v355
    %v386 = vpop.f32.mrf.mxu0
    %v387 = vadd.f32 0.0, %v386
    %388 = vmatmul.f32.gmra.mxu0 %v358
    %v389 = vpop.f32.mrf.mxu0
    %v390 = vadd.f32 0.0, %v389
    %391 = vmatmul.f32.gmra.mxu0 %v361
    %v392 = vpop.f32.mrf.mxu0
    %v393 = vadd.f32 0.0, %v392
    %394 = vmatmul.f32.gmra.mxu0 %v364
    %v395 = vpop.f32.mrf.mxu0
    %v396 = vadd.f32 0.0, %v395
    %397 = vmatmul.f32.gmra.mxu0 %v367
    %v398 = vpop.f32.mrf.mxu0
    %v399 = vadd.f32 0.0, %v398
    %400 = vdwg.mxu0
    %v401 = vmax.f32 %v340, 1e-07
    %v402 = vmax.f32 %v343, 1e-07
    %v403 = vmax.f32 %v346, 1e-07
    %v404 = vmax.f32 %v349, 1e-07
    %v405 = vmax.f32 %v352, 1e-07
    %v406 = vmax.f32 %v387, 1e-07
    %v407 = vmax.f32 %v390, 1e-07
    %v408 = vmax.f32 %v393, 1e-07
    %v409 = vmax.f32 %v396, 1e-07
    %v410 = vmax.f32 %v399, 1e-07
    %v411 = vmin.f32 %v401, 10000.0
    %v412 = vmin.f32 %v402, 10000.0
    %v413 = vmin.f32 %v403, 10000.0
    %v414 = vmin.f32 %v404, 10000.0
    %v415 = vmin.f32 %v405, 10000.0
    %v416 = vmin.f32 %v406, 10000.0
    %v417 = vmin.f32 %v407, 10000.0
    %v418 = vmin.f32 %v408, 10000.0
    %v419 = vmin.f32 %v409, 10000.0
    %v420 = vmin.f32 %v410, 10000.0
    %v421 = vlog2.pop %v411
    %v422 = vmul.f32 %v421, 0.6931472
    %v423 = vlog2.pop %v412
    %v424 = vmul.f32 %v423, 0.6931472
    %v425 = vlog2.pop %v413
    %v426 = vmul.f32 %v425, 0.6931472
    %v427 = vlog2.pop %v414
    %v428 = vmul.f32 %v427, 0.6931472
    %v429 = vlog2.pop %v415
    %v430 = vmul.f32 %v429, 0.6931472
    %v431 = vlog2.pop %v416
    %v432 = vmul.f32 %v431, 0.6931472
    %v433 = vlog2.pop %v417
    %v434 = vmul.f32 %v433, 0.6931472
    %v435 = vlog2.pop %v418
    %v436 = vmul.f32 %v435, 0.6931472
    %v437 = vlog2.pop %v419
    %v438 = vmul.f32 %v437, 0.6931472
    %v439 = vlog2.pop %v420
    %v440 = vmul.f32 %v439, 0.6931472
    %v441 = vld [vmem:[%s5] sm:$0xff]
    %v442 = vld [vmem:[%s5 + $0x8] sm:$0xff]
    %v443 = vld [vmem:[%s5 + $0x10] sm:$0xff]
    %v444 = vld [vmem:[%s5 + $0x18] sm:$0xff]
    %v445 = vld [vmem:[%s5 + $0x20] sm:$0xff]
    %v446 = vld [vmem:[%s5 + $0x28] sm:$0xff]
    %v447 = vld [vmem:[%s5 + $0x30] sm:$0xff]
    %v448 = vld [vmem:[%s5 + $0x38] sm:$0xff]
    %v449 = vld [vmem:[%s5 + $0x40] sm:$0xff]
    %v450 = vld [vmem:[%s5 + $0x48] sm:$0xff]
    %v451 = vld [vmem:[%s5 + $0x50] sm:$0xff]
    %v452 = vld [vmem:[%s5 + $0x58] sm:$0xff]
    %v453 = vld [vmem:[%s5 + $0x60] sm:$0xff]
    %v454 = vld [vmem:[%s5 + $0x68] sm:$0xff]
    %v455 = vld [vmem:[%s5 + $0x70] sm:$0xff]
    %v456 = vld [vmem:[%s5 + $0x78] sm:$0xff]
    %v457 = vld [vmem:[%s5 + $0x80] sm:$0xff]
    %v458 = vld [vmem:[%s5 + $0x88] sm:$0xff]
    %v459 = vld [vmem:[%s5 + $0x90] sm:$0xff]
    %v460 = vld [vmem:[%s5 + $0x98] sm:$0xff]
    %v461 = vld [vmem:[%s5 + $0xa0] sm:$0xff]
    %v462 = vld [vmem:[%s5 + $0xa8] sm:$0xff]
    %v463 = vld [vmem:[%s5 + $0xb0] sm:$0xff]
    %v464 = vld [vmem:[%s5 + $0xb8] sm:$0xff]
    %v465 = vld [vmem:[%s5 + $0xc0] sm:$0xff]
    %v466 = vld [vmem:[%s5 + $0xc8] sm:$0xff]
    %v467 = vld [vmem:[%s5 + $0xd0] sm:$0xff]
    %v468 = vld [vmem:[%s5 + $0xd8] sm:$0xff]
    %v469 = vld [vmem:[%s5 + $0xe0] sm:$0xff]
    %v470 = vld [vmem:[%s5 + $0xe8] sm:$0xff]
    %v471 = vld [vmem:[%s5 + $0xf0] sm:$0xff]
    %v472 = vld [vmem:[%s5 + $0xf8] sm:$0xff]
    %v473 = vld [vmem:[%s5 + $0x100] sm:$0xff]
    %v474 = vld [vmem:[%s5 + $0x108] sm:$0xff]
    %v475 = vld [vmem:[%s5 + $0x110] sm:$0xff]
    %v476 = vld [vmem:[%s5 + $0x118] sm:$0xff]
    %v477 = vld [vmem:[%s5 + $0x120] sm:$0xff]
    %v478 = vld [vmem:[%s5 + $0x128] sm:$0xff]
    %v479 = vld [vmem:[%s5 + $0x130] sm:$0xff]
    %v480 = vld [vmem:[%s5 + $0x138] sm:$0xff]
    %v481 = vmul.f32 %v441, %v422
    %v482 = vmul.f32 %v442, %v424
    %v483 = vmul.f32 %v443, %v426
    %v484 = vmul.f32 %v444, %v428
    %v485 = vmul.f32 %v445, %v430
    %v486 = vmul.f32 %v446, %v422
    %v487 = vmul.f32 %v447, %v424
    %v488 = vmul.f32 %v448, %v426
    %v489 = vmul.f32 %v449, %v428
    %v490 = vmul.f32 %v450, %v430
    %v491 = vmul.f32 %v451, %v422
    %v492 = vmul.f32 %v452, %v424
    %v493 = vmul.f32 %v453, %v426
    %v494 = vmul.f32 %v454, %v428
    %v495 = vmul.f32 %v455, %v430
    %v496 = vmul.f32 %v456, %v422
    %v497 = vmul.f32 %v457, %v424
    %v498 = vmul.f32 %v458, %v426
    %v499 = vmul.f32 %v459, %v428
    %v500 = vmul.f32 %v460, %v430
    %v501 = vmul.f32 %v461, %v422
    %v502 = vmul.f32 %v462, %v424
    %v503 = vmul.f32 %v463, %v426
    %v504 = vmul.f32 %v464, %v428
    %v505 = vmul.f32 %v465, %v430
    %v506 = vmul.f32 %v466, %v422
    %v507 = vmul.f32 %v467, %v424
    %v508 = vmul.f32 %v468, %v426
    %v509 = vmul.f32 %v469, %v428
    %v510 = vmul.f32 %v470, %v430
    %v511 = vmul.f32 %v471, %v422
    %v512 = vmul.f32 %v472, %v424
    %v513 = vmul.f32 %v473, %v426
    %v514 = vmul.f32 %v474, %v428
    %v515 = vmul.f32 %v475, %v430
    %v516 = vmul.f32 %v476, %v422
    %v517 = vmul.f32 %v477, %v424
    %v518 = vmul.f32 %v478, %v426
    %v519 = vmul.f32 %v479, %v428
    %v520 = vmul.f32 %v480, %v430
    %v521 = vmul.f32 %v441, %v432
    %v522 = vmul.f32 %v442, %v434
    %v523 = vmul.f32 %v443, %v436
    %v524 = vmul.f32 %v444, %v438
    %v525 = vmul.f32 %v445, %v440
    %v526 = vmul.f32 %v446, %v432
    %v527 = vmul.f32 %v447, %v434
    %v528 = vmul.f32 %v448, %v436
    %v529 = vmul.f32 %v449, %v438
    %v530 = vmul.f32 %v450, %v440
    %v531 = vmul.f32 %v451, %v432
    %v532 = vmul.f32 %v452, %v434
    %v533 = vmul.f32 %v453, %v436
    %v534 = vmul.f32 %v454, %v438
    %v535 = vmul.f32 %v455, %v440
    %v536 = vmul.f32 %v456, %v432
    %v537 = vmul.f32 %v457, %v434
    %v538 = vmul.f32 %v458, %v436
    %v539 = vmul.f32 %v459, %v438
    %v540 = vmul.f32 %v460, %v440
    %v541 = vmul.f32 %v461, %v432
    %v542 = vmul.f32 %v462, %v434
    %v543 = vmul.f32 %v463, %v436
    %v544 = vmul.f32 %v464, %v438
    %v545 = vmul.f32 %v465, %v440
    %v546 = vmul.f32 %v466, %v432
    %v547 = vmul.f32 %v467, %v434
    %v548 = vmul.f32 %v468, %v436
    %v549 = vmul.f32 %v469, %v438
    %v550 = vmul.f32 %v470, %v440
    %v551 = vmul.f32 %v471, %v432
    %v552 = vmul.f32 %v472, %v434
    %v553 = vmul.f32 %v473, %v436
    %v554 = vmul.f32 %v474, %v438
    %v555 = vmul.f32 %v475, %v440
    %v556 = vmul.f32 %v476, %v432
    %v557 = vmul.f32 %v477, %v434
    %v558 = vmul.f32 %v478, %v436
    %v559 = vmul.f32 %v479, %v438
    %v560 = vmul.f32 %v480, %v440
    %vm561 = vcmask 64512
    %v562 = vsel %vm561, %v481, 0.0
    %563 = vadd.xlane.f32.xlu0 %v562
    %v564 = vpop.xlane.xlu0 %563
    %v565 = vsel %vm561, %v482, 0.0
    %566 = vadd.xlane.f32.xlu0 %v565
    %v567 = vpop.xlane.xlu0 %566
    %v568 = vsel %vm561, %v483, 0.0
    %569 = vadd.xlane.f32.xlu0 %v568
    %v570 = vpop.xlane.xlu0 %569
    %v571 = vsel %vm561, %v484, 0.0
    %572 = vadd.xlane.f32.xlu0 %v571
    %v573 = vpop.xlane.xlu0 %572
    %v574 = vsel %vm561, %v485, 0.0
    %575 = vadd.xlane.f32.xlu0 %v574
    %v576 = vpop.xlane.xlu0 %575
    %v577 = vsel %vm561, %v486, 0.0
    %578 = vadd.xlane.f32.xlu0 %v577
    %v579 = vpop.xlane.xlu0 %578
    %v580 = vsel %vm561, %v487, 0.0
    %581 = vadd.xlane.f32.xlu0 %v580
    %v582 = vpop.xlane.xlu0 %581
    %v583 = vsel %vm561, %v488, 0.0
    %584 = vadd.xlane.f32.xlu0 %v583
    %v585 = vpop.xlane.xlu0 %584
    %v586 = vsel %vm561, %v489, 0.0
    %587 = vadd.xlane.f32.xlu0 %v586
    %v588 = vpop.xlane.xlu0 %587
    %v589 = vsel %vm561, %v490, 0.0
    %590 = vadd.xlane.f32.xlu0 %v589
    %v591 = vpop.xlane.xlu0 %590
    %v592 = vsel %vm561, %v491, 0.0
    %593 = vadd.xlane.f32.xlu0 %v592
    %v594 = vpop.xlane.xlu0 %593
    %v595 = vsel %vm561, %v492, 0.0
    %596 = vadd.xlane.f32.xlu0 %v595
    %v597 = vpop.xlane.xlu0 %596
    %v598 = vsel %vm561, %v493, 0.0
    %599 = vadd.xlane.f32.xlu0 %v598
    %v600 = vpop.xlane.xlu0 %599
    %v601 = vsel %vm561, %v494, 0.0
    %602 = vadd.xlane.f32.xlu0 %v601
    %v603 = vpop.xlane.xlu0 %602
    %v604 = vsel %vm561, %v495, 0.0
    %605 = vadd.xlane.f32.xlu0 %v604
    %v606 = vpop.xlane.xlu0 %605
    %v607 = vsel %vm561, %v496, 0.0
    %608 = vadd.xlane.f32.xlu0 %v607
    %v609 = vpop.xlane.xlu0 %608
    %v610 = vsel %vm561, %v497, 0.0
    %611 = vadd.xlane.f32.xlu0 %v610
    %v612 = vpop.xlane.xlu0 %611
    %v613 = vsel %vm561, %v498, 0.0
    %614 = vadd.xlane.f32.xlu0 %v613
    %v615 = vpop.xlane.xlu0 %614
    %v616 = vsel %vm561, %v499, 0.0
    %617 = vadd.xlane.f32.xlu0 %v616
    %v618 = vpop.xlane.xlu0 %617
    %v619 = vsel %vm561, %v500, 0.0
    %620 = vadd.xlane.f32.xlu0 %v619
    %v621 = vpop.xlane.xlu0 %620
    %v622 = vsel %vm561, %v501, 0.0
    %623 = vadd.xlane.f32.xlu0 %v622
    %v624 = vpop.xlane.xlu0 %623
    %v625 = vsel %vm561, %v502, 0.0
    %626 = vadd.xlane.f32.xlu0 %v625
    %v627 = vpop.xlane.xlu0 %626
    %v628 = vsel %vm561, %v503, 0.0
    %629 = vadd.xlane.f32.xlu0 %v628
    %v630 = vpop.xlane.xlu0 %629
    %v631 = vsel %vm561, %v504, 0.0
    %632 = vadd.xlane.f32.xlu0 %v631
    %v633 = vpop.xlane.xlu0 %632
    %v634 = vsel %vm561, %v505, 0.0
    %635 = vadd.xlane.f32.xlu0 %v634
    %v636 = vpop.xlane.xlu0 %635
    %v637 = vsel %vm561, %v506, 0.0
    %638 = vadd.xlane.f32.xlu0 %v637
    %v639 = vpop.xlane.xlu0 %638
    %v640 = vsel %vm561, %v507, 0.0
    %641 = vadd.xlane.f32.xlu0 %v640
    %v642 = vpop.xlane.xlu0 %641
    %v643 = vsel %vm561, %v508, 0.0
    %644 = vadd.xlane.f32.xlu0 %v643
    %v645 = vpop.xlane.xlu0 %644
    %v646 = vsel %vm561, %v509, 0.0
    %647 = vadd.xlane.f32.xlu0 %v646
    %v648 = vpop.xlane.xlu0 %647
    %v649 = vsel %vm561, %v510, 0.0
    %650 = vadd.xlane.f32.xlu0 %v649
    %v651 = vpop.xlane.xlu0 %650
    %v652 = vsel %vm561, %v511, 0.0
    %653 = vadd.xlane.f32.xlu0 %v652
    %v654 = vpop.xlane.xlu0 %653
    %v655 = vsel %vm561, %v512, 0.0
    %656 = vadd.xlane.f32.xlu0 %v655
    %v657 = vpop.xlane.xlu0 %656
    %v658 = vsel %vm561, %v513, 0.0
    %659 = vadd.xlane.f32.xlu0 %v658
    %v660 = vpop.xlane.xlu0 %659
    %v661 = vsel %vm561, %v514, 0.0
    %662 = vadd.xlane.f32.xlu0 %v661
    %v663 = vpop.xlane.xlu0 %662
    %v664 = vsel %vm561, %v515, 0.0
    %665 = vadd.xlane.f32.xlu0 %v664
    %v666 = vpop.xlane.xlu0 %665
    %v667 = vsel %vm561, %v516, 0.0
    %668 = vadd.xlane.f32.xlu0 %v667
    %v669 = vpop.xlane.xlu0 %668
    %v670 = vsel %vm561, %v517, 0.0
    %671 = vadd.xlane.f32.xlu0 %v670
    %v672 = vpop.xlane.xlu0 %671
    %v673 = vsel %vm561, %v518, 0.0
    %674 = vadd.xlane.f32.xlu0 %v673
    %v675 = vpop.xlane.xlu0 %674
    %v676 = vsel %vm561, %v519, 0.0
    %677 = vadd.xlane.f32.xlu0 %v676
    %v678 = vpop.xlane.xlu0 %677
    %v679 = vsel %vm561, %v520, 0.0
    %680 = vadd.xlane.f32.xlu0 %v679
    %v681 = vpop.xlane.xlu0 %680
    %v682 = vsel %vm561, %v521, 0.0
    %683 = vadd.xlane.f32.xlu0 %v682
    %v684 = vpop.xlane.xlu0 %683
    %v685 = vsel %vm561, %v522, 0.0
    %686 = vadd.xlane.f32.xlu0 %v685
    %v687 = vpop.xlane.xlu0 %686
    %v688 = vsel %vm561, %v523, 0.0
    %689 = vadd.xlane.f32.xlu0 %v688
    %v690 = vpop.xlane.xlu0 %689
    %v691 = vsel %vm561, %v524, 0.0
    %692 = vadd.xlane.f32.xlu0 %v691
    %v693 = vpop.xlane.xlu0 %692
    %v694 = vsel %vm561, %v525, 0.0
    %695 = vadd.xlane.f32.xlu0 %v694
    %v696 = vpop.xlane.xlu0 %695
    %v697 = vsel %vm561, %v526, 0.0
    %698 = vadd.xlane.f32.xlu0 %v697
    %v699 = vpop.xlane.xlu0 %698
    %v700 = vsel %vm561, %v527, 0.0
    %701 = vadd.xlane.f32.xlu0 %v700
    %v702 = vpop.xlane.xlu0 %701
    %v703 = vsel %vm561, %v528, 0.0
    %704 = vadd.xlane.f32.xlu0 %v703
    %v705 = vpop.xlane.xlu0 %704
    %v706 = vsel %vm561, %v529, 0.0
    %707 = vadd.xlane.f32.xlu0 %v706
    %v708 = vpop.xlane.xlu0 %707
    %v709 = vsel %vm561, %v530, 0.0
    %710 = vadd.xlane.f32.xlu0 %v709
    %v711 = vpop.xlane.xlu0 %710
    %v712 = vsel %vm561, %v531, 0.0
    %713 = vadd.xlane.f32.xlu0 %v712
    %v714 = vpop.xlane.xlu0 %713
    %v715 = vsel %vm561, %v532, 0.0
    %716 = vadd.xlane.f32.xlu0 %v715
    %v717 = vpop.xlane.xlu0 %716
    %v718 = vsel %vm561, %v533, 0.0
    %719 = vadd.xlane.f32.xlu0 %v718
    %v720 = vpop.xlane.xlu0 %719
    %v721 = vsel %vm561, %v534, 0.0
    %722 = vadd.xlane.f32.xlu0 %v721
    %v723 = vpop.xlane.xlu0 %722
    %v724 = vsel %vm561, %v535, 0.0
    %725 = vadd.xlane.f32.xlu0 %v724
    %v726 = vpop.xlane.xlu0 %725
    %v727 = vsel %vm561, %v536, 0.0
    %728 = vadd.xlane.f32.xlu0 %v727
    %v729 = vpop.xlane.xlu0 %728
    %v730 = vsel %vm561, %v537, 0.0
    %731 = vadd.xlane.f32.xlu0 %v730
    %v732 = vpop.xlane.xlu0 %731
    %v733 = vsel %vm561, %v538, 0.0
    %734 = vadd.xlane.f32.xlu0 %v733
    %v735 = vpop.xlane.xlu0 %734
    %v736 = vsel %vm561, %v539, 0.0
    %737 = vadd.xlane.f32.xlu0 %v736
    %v738 = vpop.xlane.xlu0 %737
    %v739 = vsel %vm561, %v540, 0.0
    %740 = vadd.xlane.f32.xlu0 %v739
    %v741 = vpop.xlane.xlu0 %740
    %v742 = vsel %vm561, %v541, 0.0
    %743 = vadd.xlane.f32.xlu0 %v742
    %v744 = vpop.xlane.xlu0 %743
    %v745 = vsel %vm561, %v542, 0.0
    %746 = vadd.xlane.f32.xlu0 %v745
    %v747 = vpop.xlane.xlu0 %746
    %v748 = vsel %vm561, %v543, 0.0
    %749 = vadd.xlane.f32.xlu0 %v748
    %v750 = vpop.xlane.xlu0 %749
    %v751 = vsel %vm561, %v544, 0.0
    %752 = vadd.xlane.f32.xlu0 %v751
    %v753 = vpop.xlane.xlu0 %752
    %v754 = vsel %vm561, %v545, 0.0
    %755 = vadd.xlane.f32.xlu0 %v754
    %v756 = vpop.xlane.xlu0 %755
    %v757 = vsel %vm561, %v546, 0.0
    %758 = vadd.xlane.f32.xlu0 %v757
    %v759 = vpop.xlane.xlu0 %758
    %v760 = vsel %vm561, %v547, 0.0
    %761 = vadd.xlane.f32.xlu0 %v760
    %v762 = vpop.xlane.xlu0 %761
    %v763 = vsel %vm561, %v548, 0.0
    %764 = vadd.xlane.f32.xlu0 %v763
    %v765 = vpop.xlane.xlu0 %764
    %v766 = vsel %vm561, %v549, 0.0
    %767 = vadd.xlane.f32.xlu0 %v766
    %v768 = vpop.xlane.xlu0 %767
    %v769 = vsel %vm561, %v550, 0.0
    %770 = vadd.xlane.f32.xlu0 %v769
    %v771 = vpop.xlane.xlu0 %770
    %v772 = vsel %vm561, %v551, 0.0
    %773 = vadd.xlane.f32.xlu0 %v772
    %v774 = vpop.xlane.xlu0 %773
    %v775 = vsel %vm561, %v552, 0.0
    %776 = vadd.xlane.f32.xlu0 %v775
    %v777 = vpop.xlane.xlu0 %776
    %v778 = vsel %vm561, %v553, 0.0
    %779 = vadd.xlane.f32.xlu0 %v778
    %v780 = vpop.xlane.xlu0 %779
    %v781 = vsel %vm561, %v554, 0.0
    %782 = vadd.xlane.f32.xlu0 %v781
    %v783 = vpop.xlane.xlu0 %782
    %v784 = vsel %vm561, %v555, 0.0
    %785 = vadd.xlane.f32.xlu0 %v784
    %v786 = vpop.xlane.xlu0 %785
    %v787 = vsel %vm561, %v556, 0.0
    %788 = vadd.xlane.f32.xlu0 %v787
    %v789 = vpop.xlane.xlu0 %788
    %v790 = vsel %vm561, %v557, 0.0
    %791 = vadd.xlane.f32.xlu0 %v790
    %v792 = vpop.xlane.xlu0 %791
    %v793 = vsel %vm561, %v558, 0.0
    %794 = vadd.xlane.f32.xlu0 %v793
    %v795 = vpop.xlane.xlu0 %794
    %v796 = vsel %vm561, %v559, 0.0
    %797 = vadd.xlane.f32.xlu0 %v796
    %v798 = vpop.xlane.xlu0 %797
    %v799 = vsel %vm561, %v560, 0.0
    %800 = vadd.xlane.f32.xlu0 %v799
    %v801 = vpop.xlane.xlu0 %800
    %v882 = vlaneseq
    %v883 = vand.u32 %v882, 127
    %v884 = vperm.slane %v564, %v883
    %v885 = vadd.s32 %v883, 4294967288
    %v886 = vperm.slane %v567, %v885
    %vm887 = vcmask 130112
    %v888 = vsel %vm887, %v886, %v884
    %v889 = vadd.s32 %v883, 4294967280
    %v890 = vperm.slane %v570, %v889
    %vm891 = vcmask 195712
    %v892 = vsel %vm891, %v890, %v888
    %v893 = vadd.s32 %v883, 4294967272
    %v894 = vperm.slane %v573, %v893
    %vm895 = vcmask 261312
    %v896 = vsel %vm895, %v894, %v892
    %v897 = vadd.s32 %v883, 4294967264
    %v898 = vperm.slane %v576, %v897
    %vm899 = vcmask 326912
    %v900 = vsel %vm899, %v898, %v896
    %v901 = vperm.slane %v579, %v883
    %v902 = vperm.slane %v582, %v885
    %v903 = vsel %vm887, %v902, %v901
    %v904 = vperm.slane %v585, %v889
    %v905 = vsel %vm891, %v904, %v903
    %v906 = vperm.slane %v588, %v893
    %v907 = vsel %vm895, %v906, %v905
    %v908 = vperm.slane %v591, %v897
    %v909 = vsel %vm899, %v908, %v907
    %v910 = vperm.slane %v594, %v883
    %v911 = vperm.slane %v597, %v885
    %v912 = vsel %vm887, %v911, %v910
    %v913 = vperm.slane %v600, %v889
    %v914 = vsel %vm891, %v913, %v912
    %v915 = vperm.slane %v603, %v893
    %v916 = vsel %vm895, %v915, %v914
    %v917 = vperm.slane %v606, %v897
    %v918 = vsel %vm899, %v917, %v916
    %v919 = vperm.slane %v609, %v883
    %v920 = vperm.slane %v612, %v885
    %v921 = vsel %vm887, %v920, %v919
    %v922 = vperm.slane %v615, %v889
    %v923 = vsel %vm891, %v922, %v921
    %v924 = vperm.slane %v618, %v893
    %v925 = vsel %vm895, %v924, %v923
    %v926 = vperm.slane %v621, %v897
    %v927 = vsel %vm899, %v926, %v925
    %v928 = vperm.slane %v624, %v883
    %v929 = vperm.slane %v627, %v885
    %v930 = vsel %vm887, %v929, %v928
    %v931 = vperm.slane %v630, %v889
    %v932 = vsel %vm891, %v931, %v930
    %v933 = vperm.slane %v633, %v893
    %v934 = vsel %vm895, %v933, %v932
    %v935 = vperm.slane %v636, %v897
    %v936 = vsel %vm899, %v935, %v934
    %v937 = vperm.slane %v639, %v883
    %v938 = vperm.slane %v642, %v885
    %v939 = vsel %vm887, %v938, %v937
    %v940 = vperm.slane %v645, %v889
    %v941 = vsel %vm891, %v940, %v939
    %v942 = vperm.slane %v648, %v893
    %v943 = vsel %vm895, %v942, %v941
    %v944 = vperm.slane %v651, %v897
    %v945 = vsel %vm899, %v944, %v943
    %v946 = vperm.slane %v654, %v883
    %v947 = vperm.slane %v657, %v885
    %v948 = vsel %vm887, %v947, %v946
    %v949 = vperm.slane %v660, %v889
    %v950 = vsel %vm891, %v949, %v948
    %v951 = vperm.slane %v663, %v893
    %v952 = vsel %vm895, %v951, %v950
    %v953 = vperm.slane %v666, %v897
    %v954 = vsel %vm899, %v953, %v952
    %v955 = vperm.slane %v669, %v883
    %v956 = vperm.slane %v672, %v885
    %v957 = vsel %vm887, %v956, %v955
    %v958 = vperm.slane %v675, %v889
    %v959 = vsel %vm891, %v958, %v957
    %v960 = vperm.slane %v678, %v893
    %v961 = vsel %vm895, %v960, %v959
    %v962 = vperm.slane %v681, %v897
    %v963 = vsel %vm899, %v962, %v961
    %v964 = vperm.slane %v684, %v883
    %v965 = vperm.slane %v687, %v885
    %v966 = vsel %vm887, %v965, %v964
    %v967 = vperm.slane %v690, %v889
    %v968 = vsel %vm891, %v967, %v966
    %v969 = vperm.slane %v693, %v893
    %v970 = vsel %vm895, %v969, %v968
    %v971 = vperm.slane %v696, %v897
    %v972 = vsel %vm899, %v971, %v970
    %v973 = vperm.slane %v699, %v883
    %v974 = vperm.slane %v702, %v885
    %v975 = vsel %vm887, %v974, %v973
    %v976 = vperm.slane %v705, %v889
    %v977 = vsel %vm891, %v976, %v975
    %v978 = vperm.slane %v708, %v893
    %v979 = vsel %vm895, %v978, %v977
    %v980 = vperm.slane %v711, %v897
    %v981 = vsel %vm899, %v980, %v979
    %v982 = vperm.slane %v714, %v883
    %v983 = vperm.slane %v717, %v885
    %v984 = vsel %vm887, %v983, %v982
    %v985 = vperm.slane %v720, %v889
    %v986 = vsel %vm891, %v985, %v984
    %v987 = vperm.slane %v723, %v893
    %v988 = vsel %vm895, %v987, %v986
    %v989 = vperm.slane %v726, %v897
    %v990 = vsel %vm899, %v989, %v988
    %v991 = vperm.slane %v729, %v883
    %v992 = vperm.slane %v732, %v885
    %v993 = vsel %vm887, %v992, %v991
    %v994 = vperm.slane %v735, %v889
    %v995 = vsel %vm891, %v994, %v993
    %v996 = vperm.slane %v738, %v893
    %v997 = vsel %vm895, %v996, %v995
    %v998 = vperm.slane %v741, %v897
    %v999 = vsel %vm899, %v998, %v997
    %v1000 = vperm.slane %v744, %v883
    %v1001 = vperm.slane %v747, %v885
    %v1002 = vsel %vm887, %v1001, %v1000
    %v1003 = vperm.slane %v750, %v889
    %v1004 = vsel %vm891, %v1003, %v1002
    %v1005 = vperm.slane %v753, %v893
    %v1006 = vsel %vm895, %v1005, %v1004
    %v1007 = vperm.slane %v756, %v897
    %v1008 = vsel %vm899, %v1007, %v1006
    %v1009 = vperm.slane %v759, %v883
    %v1010 = vperm.slane %v762, %v885
    %v1011 = vsel %vm887, %v1010, %v1009
    %v1012 = vperm.slane %v765, %v889
    %v1013 = vsel %vm891, %v1012, %v1011
    %v1014 = vperm.slane %v768, %v893
    %v1015 = vsel %vm895, %v1014, %v1013
    %v1016 = vperm.slane %v771, %v897
    %v1017 = vsel %vm899, %v1016, %v1015
    %v1018 = vperm.slane %v774, %v883
    %v1019 = vperm.slane %v777, %v885
    %v1020 = vsel %vm887, %v1019, %v1018
    %v1021 = vperm.slane %v780, %v889
    %v1022 = vsel %vm891, %v1021, %v1020
    %v1023 = vperm.slane %v783, %v893
    %v1024 = vsel %vm895, %v1023, %v1022
    %v1025 = vperm.slane %v786, %v897
    %v1026 = vsel %vm899, %v1025, %v1024
    %v1027 = vperm.slane %v789, %v883
    %v1028 = vperm.slane %v792, %v885
    %v1029 = vsel %vm887, %v1028, %v1027
    %v1030 = vperm.slane %v795, %v889
    %v1031 = vsel %vm891, %v1030, %v1029
    %v1032 = vperm.slane %v798, %v893
    %v1033 = vsel %vm895, %v1032, %v1031
    %v1034 = vperm.slane %v801, %v897
    %v1035 = vsel %vm899, %v1034, %v1033
    %vm1036 = vcmask 1041409
    %v1037 = vsel %vm1036, %v909, %v900
    %vm1038 = vcmask 1042434
    %v1039 = vsel %vm1038, %v918, %v1037
    %vm1040 = vcmask 1043459
    %v1041 = vsel %vm1040, %v927, %v1039
    %vm1042 = vcmask 1044484
    %v1043 = vsel %vm1042, %v936, %v1041
    %vm1044 = vcmask 1045509
    %v1045 = vsel %vm1044, %v945, %v1043
    %vm1046 = vcmask 1046534
    %v1047 = vsel %vm1046, %v954, %v1045
    %vm1048 = vcmask 1047559
    %v1049 = vsel %vm1048, %v963, %v1047
    %v1050 = vsel %vm1036, %v981, %v972
    %v1051 = vsel %vm1038, %v990, %v1050
    %v1052 = vsel %vm1040, %v999, %v1051
    %v1053 = vsel %vm1042, %v1008, %v1052
    %v1054 = vsel %vm1044, %v1017, %v1053
    %v1055 = vsel %vm1046, %v1026, %v1054
    %v1056 = vsel %vm1048, %v1035, %v1055
    %vm1059 = vcmask 326656
    %v1060 = vsel %vm1059, %v1049, 0.0
    %1061 = vadd.xlane.f32.xlu0 %v1060
    %v1062 = vpop.xlane.xlu0 %1061
    %v1063 = vsel %vm1059, %v1056, 0.0
    %1064 = vadd.xlane.f32.xlu0 %v1063
    %v1065 = vpop.xlane.xlu0 %1064
    %v1068 = vperm.slane %v1062, %v883
    %v1069 = vperm.slane %v1065, %v883
    %v1070 = vsel %vm1036, %v1069, %v1068
    %vm1072 = vcmask 58368
    %1073 = vst.msk [vmem:[#allocation2] sm:$0x3] %vm1072, %v1070
    // Predicated region
    $region26: #{tpu_custom_call.1} parent=1 // pred_check
      _
    $region27: #{tpu_custom_call.1} parent=1 // pred_check_branch
      %1075 = sbr.rel (0) target = $region29
    $region28: #{tpu_custom_call.1} parent=1 // pred_region
      %1077 = vsyncadd [#allocation3], 0
      %s1079 = sshll.u32 [#allocation2], 4
      %s1080 = int_to_ptr.vmem [resolvable:$true] %s1079
      %s1081 = sshll.u32 %s6, 4
      %s1082 = int_to_ptr.hbm [resolvable:$true] %s1081
      %1084 = dma.vmem_to_hbm [thread:$0]  %s1080, 32, %s1082, [#allocation3]
    $region29: #{tpu_custom_call.1} parent=1 // pred_fallthru
      _
    // Predicated region
    $region30: #{tpu_custom_call.1} parent=1 // pred_check
      _
    $region31: #{tpu_custom_call.1} parent=1 // pred_check_branch
      %1086 = sbr.rel (0) target = $region33
    $region32: #{tpu_custom_call.1} parent=1 // pred_region
      %1088 = dma.done [#allocation3], 32
    $region33: #{tpu_custom_call.1} parent=1 // pred_fallthru
      _
    %1089 = vsyncpa [#allocation3], 1

</llo_original>
